<compile_context>
chip_gen: v6e
topology: v6e:2x2x1
jax: 0.10.0
libtpu: 0.0.40
codegen_flags: <defaults>
</compile_context>

<pallas_src>
import jax
import jax.numpy as jnp
from jax.experimental import pallas as pl
from jax.experimental.pallas import tpu as pltpu


def _round_up(x, m):
    return ((x + m - 1) // m) * m


# Conservative budget for keeping *all* layer weights + A_hat resident at once
# (unrolled path). Above this we fall back to the layer-pipelined grid.
_UNROLLED_VMEM_BUDGET = 32 * 1024 * 1024
_VMEM_LIMIT_CAP = 64 * 1024 * 1024          # v7x physical VMEM per TC


# ----------------------------------------------------------------------------
# Path A: single grid step, layers statically unrolled, per-layer exact padding
# ----------------------------------------------------------------------------
def _make_unrolled_kernel(num_layers):
    def kernel(a_ref, x_ref, *refs):
        # refs = (w_0, b_0, ..., w_{L-1}, b_{L-1}, o_ref)
        o_ref = refs[2 * num_layers]
        h = x_ref[...]                                   # bf16 carry
        out_f32 = None
        for l in range(num_layers):
            w_ref = refs[2 * l]
            b_ref = refs[2 * l + 1]
            # Feature transform on the MXU, f32 accumulation.
            xw = jnp.dot(h, w_ref[...], preferred_element_type=jnp.float32)
            # Neighborhood aggregation, bf16 MXU inputs, f32 accumulation.
            agg = jnp.dot(a_ref[...], xw.astype(jnp.bfloat16),
                          preferred_element_type=jnp.float32)
            out_f32 = agg + b_ref[...]
            if l + 1 < num_layers:
                h = out_f32.astype(jnp.bfloat16)         # bf16 carry between layers
        o_ref[...] = out_f32
    return kernel


def _gcn_unrolled(a_pad, x_pad, padded_params):
    num_layers = len(padded_params)
    n_pad = a_pad.shape[0]
    d_out_pad = padded_params[-1][0].shape[1]

    in_specs = [
        pl.BlockSpec(a_pad.shape, lambda i: (0, 0)),
        pl.BlockSpec(x_pad.shape, lambda i: (0, 0)),
    ]
    flat_params = []
    flops = 0
    bytes_accessed = a_pad.size * 2 + x_pad.size * 2 + n_pad * d_out_pad * 4
    d_max = x_pad.shape[1]
    for w_p, b_p in padded_params:
        in_specs.append(pl.BlockSpec(w_p.shape, lambda i: (0, 0)))
        in_specs.append(pl.BlockSpec(b_p.shape, lambda i: (0, 0)))
        flat_params.extend([w_p, b_p])
        dk, dn = w_p.shape
        d_max = max(d_max, dn)
        flops += 2 * n_pad * dk * dn + 2 * n_pad * n_pad * dn
        bytes_accessed += w_p.size * 2 + b_p.size * 4

    # VMEM sizing: resident buffers (x2 for pipeline buffering headroom even
    # though the grid has a single step) + in-flight f32/bf16 temporaries.
    resident = (a_pad.size * 2 + x_pad.size * 2
                + sum(w.size * 2 + b.size * 4 for w, b in padded_params)
                + n_pad * d_out_pad * 4)
    temporaries = n_pad * d_max * (4 + 2 + 4 + 2)
    vmem_limit = min(max(2 * resident + temporaries + (4 << 20), 32 << 20),
                     _VMEM_LIMIT_CAP)

    grid_spec = pltpu.PrefetchScalarGridSpec(
        num_scalar_prefetch=0,
        grid=(1,),
        in_specs=in_specs,
        out_specs=pl.BlockSpec((n_pad, d_out_pad), lambda i: (0, 0)),
    )
    return pl.pallas_call(
        _make_unrolled_kernel(num_layers),
        out_shape=jax.ShapeDtypeStruct((n_pad, d_out_pad), jnp.float32),
        grid_spec=grid_spec,
        compiler_params=pltpu.CompilerParams(
            dimension_semantics=("arbitrary",),
            vmem_limit_bytes=vmem_limit,
        ),
        cost_estimate=pl.CostEstimate(
            flops=flops, transcendentals=0, bytes_accessed=bytes_accessed),
    )(a_pad, x_pad, *flat_params)


# ----------------------------------------------------------------------------
# Path B: grid over layers, uniform padding, weights streamed per grid step
# ----------------------------------------------------------------------------
def _layer_grid_kernel(a_ref, x_ref, w_ref, b_ref, o_ref, h_ref):
    """a_ref:(Np,Np) bf16 resident; x_ref:(Np,Dp) bf16; w_ref:(1,Dp,Dp) bf16;
    b_ref:(1,1,Dp) f32; o_ref:(Np,Dp) f32; h_ref:(Np,Dp) bf16 carry scratch."""
    layer = pl.program_id(0)
    last = pl.num_programs(0) - 1

    @pl.when(layer == 0)
    def _init():
        h_ref[...] = x_ref[...]

    xw = jnp.dot(h_ref[...], w_ref[0], preferred_element_type=jnp.float32)
    agg = jnp.dot(a_ref[...], xw.astype(jnp.bfloat16),
                  preferred_element_type=jnp.float32)
    h_new = agg + b_ref[0]

    @pl.when(layer < last)
    def _carry():
        h_ref[...] = h_new.astype(jnp.bfloat16)

    @pl.when(layer == last)
    def _finalize():
        o_ref[...] = h_new


def _gcn_layer_grid(a_pad, x_pad, w_stack, b_stack):
    num_layers, d_pad, _ = w_stack.shape
    n_pad = a_pad.shape[0]

    flops = num_layers * (2 * n_pad * d_pad * d_pad + 2 * n_pad * n_pad * d_pad)
    bytes_accessed = (a_pad.size * 2 + x_pad.size * 2 + w_stack.size * 2
                      + b_stack.size * 4 + n_pad * d_pad * 4)
    resident = (a_pad.size * 2 + x_pad.size * 2              # single-buffered
                + 2 * (d_pad * d_pad * 2 + d_pad * 4)        # double-buffered W/b
                + n_pad * d_pad * 4                          # output, single-buffered
                + n_pad * d_pad * 2)                         # bf16 carry scratch
    temporaries = n_pad * d_pad * (4 + 2 + 4)
    vmem_limit = min(max(resident + temporaries + (4 << 20), 32 << 20),
                     _VMEM_LIMIT_CAP)

    grid_spec = pltpu.PrefetchScalarGridSpec(
        num_scalar_prefetch=0,
        grid=(num_layers,),
        in_specs=[
            # Constant block index -> resident; single-buffer (no wasted copy).
            pl.BlockSpec((n_pad, n_pad), lambda l: (0, 0),
                         pipeline_mode=pl.Buffered(1)),
            pl.BlockSpec((n_pad, d_pad), lambda l: (0, 0),
                         pipeline_mode=pl.Buffered(1)),
            # Per-layer weight / bias, streamed (default double-buffering).
            pl.BlockSpec((1, d_pad, d_pad), lambda l: (l, 0, 0)),
            pl.BlockSpec((1, 1, d_pad), lambda l: (l, 0, 0)),
        ],
        out_specs=pl.BlockSpec((n_pad, d_pad), lambda l: (0, 0),
                               pipeline_mode=pl.Buffered(1)),
        scratch_shapes=[pltpu.VMEM((n_pad, d_pad), jnp.bfloat16)],
    )
    return pl.pallas_call(
        _layer_grid_kernel,
        out_shape=jax.ShapeDtypeStruct((n_pad, d_pad), jnp.float32),
        grid_spec=grid_spec,
        compiler_params=pltpu.CompilerParams(
            dimension_semantics=("arbitrary",),     # sequential carry over layers
            vmem_limit_bytes=vmem_limit,
        ),
        cost_estimate=pl.CostEstimate(
            flops=flops, transcendentals=0, bytes_accessed=bytes_accessed),
    )(a_pad, x_pad, w_stack, b_stack)


# ----------------------------------------------------------------------------
# Forward wrapper (jitted: padding/stacking fuses with the kernel call)
# ----------------------------------------------------------------------------
@jax.jit
def multi_gnn_forward(a_hat, feat, params):
    """MultiGNN.forward on a dense normalized adjacency."""
    n = a_hat.shape[0]
    din = feat.shape[1]
    dout = params[-1][0].shape[1]
    num_layers = len(params)

    n_pad = _round_up(n, 128)
    # NOTE: on v6e/v7x, dims > 128 would ideally pad to multiples of 256 to fill
    # the 2x256^2 MXU; 128 is kept here since the demo dims are all <= 128.
    a_pad = (jnp.zeros((n_pad, n_pad), jnp.float32)
             .at[:n, :n].set(a_hat).astype(jnp.bfloat16))

    # Per-layer minimal padding (no global d_pad inflation).
    din_pad = _round_up(din, 128)
    x_pad = (jnp.zeros((n_pad, din_pad), jnp.float32)
             .at[:n, :din].set(feat).astype(jnp.bfloat16))
    padded_params = []
    for (w, b) in params:
        dk, dn = w.shape
        dk_pad, dn_pad = _round_up(dk, 128), _round_up(dn, 128)
        w_p = (jnp.zeros((dk_pad, dn_pad), jnp.float32)
               .at[:dk, :dn].set(w).astype(jnp.bfloat16))
        b_p = jnp.zeros((1, dn_pad), jnp.float32).at[:, :dn].set(b)
        padded_params.append((w_p, b_p))

    # Choose execution path from the estimated resident VMEM of the unrolled path.
    unrolled_resident = 2 * (
        a_pad.size * 2 + x_pad.size * 2
        + sum(w.size * 2 + b.size * 4 for w, b in padded_params)
        + n_pad * padded_params[-1][0].shape[1] * 4)

    if unrolled_resident <= _UNROLLED_VMEM_BUDGET:
        out_pad = _gcn_unrolled(a_pad, x_pad, padded_params)
    else:
        # Layer-pipelined fallback: uniform padding so W/b stack along the grid axis.
        all_dims = [din] + [w.shape[1] for (w, _) in params]
        d_pad = max(_round_up(d, 128) for d in all_dims)
        x_pad_u = (jnp.zeros((n_pad, d_pad), jnp.float32)
                   .at[:n, :din].set(feat).astype(jnp.bfloat16))
        w_stack = jnp.zeros((num_layers, d_pad, d_pad), jnp.float32)
        b_stack = jnp.zeros((num_layers, 1, d_pad), jnp.float32)
        for l, (w, b) in enumerate(params):
            dk, dn = w.shape
            w_stack = w_stack.at[l, :dk, :dn].set(w)
            b_stack = b_stack.at[l, :1, :dn].set(b)
        out_pad = _gcn_layer_grid(a_pad, x_pad_u,
                                  w_stack.astype(jnp.bfloat16), b_stack)

    return out_pad[:n, :dout]


# ----------------------------------------------------------------------------
# Reference, graph / param construction, demo
# ----------------------------------------------------------------------------
def multi_gnn_reference(a_hat, feat, params):
    """Plain-JAX f32 reference of the same forward pass."""
    h = feat
    for (w, b) in params:
        h = a_hat @ (h @ w) + b
    return h


def build_normalized_adjacency(key, num_nodes, edge_prob=0.15):
    """Random symmetric graph, add self loops, symmetric D^{-1/2} normalization."""
    upper = jax.random.bernoulli(key, p=edge_prob, shape=(num_nodes, num_nodes))
    upper = jnp.triu(upper.astype(jnp.float32), k=1)
    adj = upper + upper.T                                   # symmetric, no self loops
    adj = adj + jnp.eye(num_nodes, dtype=jnp.float32)       # dgl.add_self_loop
    deg = jnp.sum(adj, axis=1)
    d_inv_sqrt = jnp.where(deg > 0, 1.0 / jnp.sqrt(deg), 0.0)
    return adj * d_inv_sqrt[:, None] * d_inv_sqrt[None, :]


def init_multi_gnn_params(key, in_dim, out_dim, hid_dim, num_layers):
    """Deterministic Glorot-style init matching MultiGNN's layer stacking."""
    dims = []
    remaining = num_layers - 1
    dims.append((in_dim, hid_dim if remaining else out_dim))
    while remaining:
        remaining -= 1
        dims.append((hid_dim, hid_dim if remaining else out_dim))
    params = []
    for (di, do) in dims:
        kw, key = jax.random.split(key)
        scale = jnp.sqrt(6.0 / (di + do))
        w = jax.random.uniform(kw, (di, do), jnp.float32, -scale, scale)
        b = jnp.zeros((1, do), jnp.float32)
        params.append((w, b))
    return params


if __name__ == "__main__":
    key = jax.random.PRNGKey(0)
    k_graph, k_feat, k_param = jax.random.split(key, 3)

    num_nodes = 64
    in_dim = 8
    hid_dim = 32
    out_dim = 4
    num_layers = 2

    a_hat = build_normalized_adjacency(k_graph, num_nodes)
    feat = jax.random.normal(k_feat, (num_nodes, in_dim), jnp.float32)
    params = init_multi_gnn_params(k_param, in_dim, out_dim, hid_dim, num_layers)

    out = multi_gnn_forward(a_hat, feat, params)
    out = jax.block_until_ready(out)
    assert out.shape == (num_nodes, out_dim)

    ref = multi_gnn_reference(a_hat, feat, params)
    assert bool(jnp.all(jnp.isfinite(out)))
    # bf16 MXU inputs / bf16 layer carry with f32 accumulation -> loose tolerance.
    assert bool(jnp.allclose(out, ref, rtol=3e-2, atol=3e-2))

    print("KERNEL_OK")
</pallas_src>

<mosaic_0001>
module attributes {stable_mosaic.version = 11 : i64} {
  func.func @kernel(%arg0: i32, %arg1: memref<128x128xbf16, #tpu.memory_space<vmem>>, %arg2: memref<128x128xbf16, #tpu.memory_space<vmem>>, %arg3: memref<128x128xbf16, #tpu.memory_space<vmem>>, %arg4: memref<1x128xf32, #tpu.memory_space<vmem>>, %arg5: memref<128x128xbf16, #tpu.memory_space<vmem>>, %arg6: memref<1x128xf32, #tpu.memory_space<vmem>>, %arg7: memref<128x128xf32, #tpu.memory_space<vmem>>) attributes {dimension_semantics = [#tpu.dimension_semantics<arbitrary>], iteration_bounds = array<i64: 1>, scalar_prefetch = 0 : i64, scratch_operands = 0 : i64, tpu.core_type = #tpu.core_type<tc>, window_params = [{pipeline_mode = #tpu.pipeline_mode<synchronous>, transform_indices = @transform_0, window_bounds = array<i64: 128, 128>}, {pipeline_mode = #tpu.pipeline_mode<synchronous>, transform_indices = @transform_1, window_bounds = array<i64: 128, 128>}, {pipeline_mode = #tpu.pipeline_mode<synchronous>, transform_indices = @transform_2, window_bounds = array<i64: 128, 128>}, {pipeline_mode = #tpu.pipeline_mode<synchronous>, transform_indices = @transform_3, window_bounds = array<i64: 1, 128>}, {pipeline_mode = #tpu.pipeline_mode<synchronous>, transform_indices = @transform_4, window_bounds = array<i64: 128, 128>}, {pipeline_mode = #tpu.pipeline_mode<synchronous>, transform_indices = @transform_5, window_bounds = array<i64: 1, 128>}, {pipeline_mode = #tpu.pipeline_mode<synchronous>, transform_indices = @transform_6, window_bounds = array<i64: 128, 128>}]} {
    %c0 = arith.constant 0 : index
    %c0_0 = arith.constant 0 : index
    %0 = vector.load %arg2[%c0, %c0_0] : memref<128x128xbf16, #tpu.memory_space<vmem>>, vector<128x128xbf16>
    %c0_1 = arith.constant 0 : index
    %c0_2 = arith.constant 0 : index
    %1 = vector.load %arg3[%c0_1, %c0_2] : memref<128x128xbf16, #tpu.memory_space<vmem>>, vector<128x128xbf16>
    %cst = arith.constant dense<0.000000e+00> : vector<128x128xf32>
    %2 = tpu.matmul %0, %1, %cst {dimension_numbers = #tpu.dot_dimension_numbers<[1], [0], [0], [1], [0, 0, 1, 1], [], []>} : vector<128x128xbf16>, vector<128x128xbf16>, vector<128x128xf32> -> vector<128x128xf32>
    %c0_3 = arith.constant 0 : index
    %c0_4 = arith.constant 0 : index
    %3 = vector.load %arg1[%c0_3, %c0_4] : memref<128x128xbf16, #tpu.memory_space<vmem>>, vector<128x128xbf16>
    %4 = arith.truncf %2 : vector<128x128xf32> to vector<128x128xbf16>
    %cst_5 = arith.constant dense<0.000000e+00> : vector<128x128xf32>
    %5 = tpu.matmul %3, %4, %cst_5 {dimension_numbers = #tpu.dot_dimension_numbers<[1], [0], [0], [1], [0, 0, 1, 1], [], []>} : vector<128x128xbf16>, vector<128x128xbf16>, vector<128x128xf32> -> vector<128x128xf32>
    %c0_6 = arith.constant 0 : index
    %c0_7 = arith.constant 0 : index
    %6 = vector.load %arg4[%c0_6, %c0_7] : memref<1x128xf32, #tpu.memory_space<vmem>>, vector<1x128xf32>
    %7 = vector.broadcast %6 : vector<1x128xf32> to vector<128x128xf32>
    %8 = arith.addf %5, %7 : vector<128x128xf32>
    %9 = arith.truncf %8 : vector<128x128xf32> to vector<128x128xbf16>
    %c0_8 = arith.constant 0 : index
    %c0_9 = arith.constant 0 : index
    %10 = vector.load %arg5[%c0_8, %c0_9] : memref<128x128xbf16, #tpu.memory_space<vmem>>, vector<128x128xbf16>
    %cst_10 = arith.constant dense<0.000000e+00> : vector<128x128xf32>
    %11 = tpu.matmul %9, %10, %cst_10 {dimension_numbers = #tpu.dot_dimension_numbers<[1], [0], [0], [1], [0, 0, 1, 1], [], []>} : vector<128x128xbf16>, vector<128x128xbf16>, vector<128x128xf32> -> vector<128x128xf32>
    %c0_11 = arith.constant 0 : index
    %c0_12 = arith.constant 0 : index
    %12 = vector.load %arg1[%c0_11, %c0_12] : memref<128x128xbf16, #tpu.memory_space<vmem>>, vector<128x128xbf16>
    %13 = arith.truncf %11 : vector<128x128xf32> to vector<128x128xbf16>
    %cst_13 = arith.constant dense<0.000000e+00> : vector<128x128xf32>
    %14 = tpu.matmul %12, %13, %cst_13 {dimension_numbers = #tpu.dot_dimension_numbers<[1], [0], [0], [1], [0, 0, 1, 1], [], []>} : vector<128x128xbf16>, vector<128x128xbf16>, vector<128x128xf32> -> vector<128x128xf32>
    %c0_14 = arith.constant 0 : index
    %c0_15 = arith.constant 0 : index
    %15 = vector.load %arg6[%c0_14, %c0_15] : memref<1x128xf32, #tpu.memory_space<vmem>>, vector<1x128xf32>
    %16 = vector.broadcast %15 : vector<1x128xf32> to vector<128x128xf32>
    %17 = arith.addf %14, %16 : vector<128x128xf32>
    %c0_16 = arith.constant 0 : index
    %c0_17 = arith.constant 0 : index
    %18 = vector.load %arg7[%c0_16, %c0_17] : memref<128x128xf32, #tpu.memory_space<vmem>>, vector<128x128xf32>
    tpu.vector_store %arg7[%c0_16, %c0_17], %17 {strides = array<i32>} : memref<128x128xf32, #tpu.memory_space<vmem>>, vector<128x128xf32>,
    return
  }
  func.func @transform_0(%arg0: i32) -> (i32, i32) {
    %c0_i32 = arith.constant 0 : i32
    %c0_i32_0 = arith.constant 0 : i32
    %c0_i32_1 = arith.constant 0 : i32
    return %c0_i32, %c0_i32_0 : i32, i32
  }
  func.func @transform_1(%arg0: i32) -> (i32, i32) {
    %c0_i32 = arith.constant 0 : i32
    %c0_i32_0 = arith.constant 0 : i32
    %c0_i32_1 = arith.constant 0 : i32
    return %c0_i32, %c0_i32_0 : i32, i32
  }
  func.func @transform_2(%arg0: i32) -> (i32, i32) {
    %c0_i32 = arith.constant 0 : i32
    %c0_i32_0 = arith.constant 0 : i32
    %c0_i32_1 = arith.constant 0 : i32
    return %c0_i32, %c0_i32_0 : i32, i32
  }
  func.func @transform_3(%arg0: i32) -> (i32, i32) {
    %c0_i32 = arith.constant 0 : i32
    %c0_i32_0 = arith.constant 0 : i32
    %c0_i32_1 = arith.constant 0 : i32
    return %c0_i32, %c0_i32_0 : i32, i32
  }
  func.func @transform_4(%arg0: i32) -> (i32, i32) {
    %c0_i32 = arith.constant 0 : i32
    %c0_i32_0 = arith.constant 0 : i32
    %c0_i32_1 = arith.constant 0 : i32
    return %c0_i32, %c0_i32_0 : i32, i32
  }
  func.func @transform_5(%arg0: i32) -> (i32, i32) {
    %c0_i32 = arith.constant 0 : i32
    %c0_i32_0 = arith.constant 0 : i32
    %c0_i32_1 = arith.constant 0 : i32
    return %c0_i32, %c0_i32_0 : i32, i32
  }
  func.func @transform_6(%arg0: i32) -> (i32, i32) {
    %c0_i32 = arith.constant 0 : i32
    %c0_i32_0 = arith.constant 0 : i32
    %c0_i32_1 = arith.constant 0 : i32
    return %c0_i32, %c0_i32_0 : i32, i32
  }
}

</mosaic_0001>

<llo_original>
// kernel: multi_gnn_forward.1
$region0: #{multi_gnn_forward.1}
  #allocation0 [shape = 'u32[]', space=smem, size = 0x4, offset = 0x4, fixed_abs, tag = 'smem constant byte address 0x4 - core index']
  #allocation1 [shape = 'u32[144,128]{1,0:T(1,128)}', space=vmem, size = 0x12000, scoped, tag = 'internal scratch']
  %s0 = inlined_call_operand.vmem [shape: bf16[128,128], index: 0, kind: input, shape index: {}]
  %s1 = inlined_call_operand.vmem [shape: bf16[128,128], index: 1, kind: input, shape index: {}]
  %s2 = inlined_call_operand.vmem [shape: bf16[128,128], index: 2, kind: input, shape index: {}]
  %s3 = inlined_call_operand.vmem [shape: f32[1,128], index: 3, kind: input, shape index: {}]
  %s4 = inlined_call_operand.vmem [shape: bf16[128,128], index: 4, kind: input, shape index: {}]
  %s5 = inlined_call_operand.vmem [shape: f32[1,128], index: 5, kind: input, shape index: {}]
  %s6 = inlined_call_operand.vmem [shape: f32[128,128], index: 6, kind: output, shape index: {}]
  %s7 = sld [smem:[#allocation0]]
  $region34: #{multi_gnn_forward.1} parent=0
    _
  %s9 = ssub.s32 1, %s7
  %s10 = scalar_select 0, %s9, %s7
  // Predicated region
  $region2: #{multi_gnn_forward.1} parent=0 // pred_check
    _
  $region3: #{multi_gnn_forward.1} parent=0 // pred_check_branch
    %12 = sbr.rel (0) target = $region5
  $region4: #{multi_gnn_forward.1} parent=0 // pred_region
    _
  $region5: #{multi_gnn_forward.1} parent=0 // pred_fallthru
    _
  // Predicated region
  $region6: #{multi_gnn_forward.1} parent=0 // pred_check
    _
  $region7: #{multi_gnn_forward.1} parent=0 // pred_check_branch
    %14 = sbr.rel (0) target = $region9
  $region8: #{multi_gnn_forward.1} parent=0 // pred_region
    _
  $region9: #{multi_gnn_forward.1} parent=0 // pred_fallthru
    _
  // Predicated region
  $region10: #{multi_gnn_forward.1} parent=0 // pred_check
    _
  $region11: #{multi_gnn_forward.1} parent=0 // pred_check_branch
    %16 = sbr.rel (0) target = $region13
  $region12: #{multi_gnn_forward.1} parent=0 // pred_region
    _
  $region13: #{multi_gnn_forward.1} parent=0 // pred_fallthru
    _
  // Predicated region
  $region14: #{multi_gnn_forward.1} parent=0 // pred_check
    _
  $region15: #{multi_gnn_forward.1} parent=0 // pred_check_branch
    %18 = sbr.rel (0) target = $region17
  $region16: #{multi_gnn_forward.1} parent=0 // pred_region
    _
  $region17: #{multi_gnn_forward.1} parent=0 // pred_fallthru
    _
  // Predicated region
  $region18: #{multi_gnn_forward.1} parent=0 // pred_check
    _
  $region19: #{multi_gnn_forward.1} parent=0 // pred_check_branch
    %20 = sbr.rel (0) target = $region21
  $region20: #{multi_gnn_forward.1} parent=0 // pred_region
    _
  $region21: #{multi_gnn_forward.1} parent=0 // pred_fallthru
    _
  // Predicated region
  $region22: #{multi_gnn_forward.1} parent=0 // pred_check
    _
  $region23: #{multi_gnn_forward.1} parent=0 // pred_check_branch
    %22 = sbr.rel (0) target = $region25
  $region24: #{multi_gnn_forward.1} parent=0 // pred_region
    _
  $region25: #{multi_gnn_forward.1} parent=0 // pred_fallthru
    _
  %v24 = vld [vmem:[%s1] sm:$0xf]
  %v25 = vld [vmem:[%s1 + $0x4] sm:$0xf]
  %v26 = vld [vmem:[%s1 + $0x8] sm:$0xf]
  %v27 = vld [vmem:[%s1 + $0xc] sm:$0xf]
  %v28 = vld [vmem:[%s1 + $0x10] sm:$0xf]
  %v29 = vld [vmem:[%s1 + $0x14] sm:$0xf]
  %v30 = vld [vmem:[%s1 + $0x18] sm:$0xf]
  %v31 = vld [vmem:[%s1 + $0x1c] sm:$0xf]
  %v32 = vld [vmem:[%s1 + $0x20] sm:$0xf]
  %v33 = vld [vmem:[%s1 + $0x24] sm:$0xf]
  %v34 = vld [vmem:[%s1 + $0x28] sm:$0xf]
  %v35 = vld [vmem:[%s1 + $0x2c] sm:$0xf]
  %v36 = vld [vmem:[%s1 + $0x30] sm:$0xf]
  %v37 = vld [vmem:[%s1 + $0x34] sm:$0xf]
  %v38 = vld [vmem:[%s1 + $0x38] sm:$0xf]
  %v39 = vld [vmem:[%s1 + $0x3c] sm:$0xf]
  %v40 = vld [vmem:[%s2] sm:$0xf]
  %v41 = vld [vmem:[%s2 + $0x4] sm:$0xf]
  %v42 = vld [vmem:[%s2 + $0x8] sm:$0xf]
  %v43 = vld [vmem:[%s2 + $0xc] sm:$0xf]
  %v44 = vld [vmem:[%s2 + $0x10] sm:$0xf]
  %v45 = vld [vmem:[%s2 + $0x14] sm:$0xf]
  %v46 = vld [vmem:[%s2 + $0x18] sm:$0xf]
  %v47 = vld [vmem:[%s2 + $0x1c] sm:$0xf]
  %v48 = vld [vmem:[%s2 + $0x20] sm:$0xf]
  %v49 = vld [vmem:[%s2 + $0x24] sm:$0xf]
  %v50 = vld [vmem:[%s2 + $0x28] sm:$0xf]
  %v51 = vld [vmem:[%s2 + $0x2c] sm:$0xf]
  %v52 = vld [vmem:[%s2 + $0x30] sm:$0xf]
  %v53 = vld [vmem:[%s2 + $0x34] sm:$0xf]
  %v54 = vld [vmem:[%s2 + $0x38] sm:$0xf]
  %v55 = vld [vmem:[%s2 + $0x3c] sm:$0xf]
  %v72 = vunpack.c.l.b16 %v24
  %v73 = vunpack.c.l.b16 %v25
  %v74 = vunpack.c.l.b16 %v26
  %v75 = vunpack.c.l.b16 %v27
  %v76 = vunpack.c.l.b16 %v28
  %v77 = vunpack.c.l.b16 %v29
  %v78 = vunpack.c.l.b16 %v30
  %v79 = vunpack.c.l.b16 %v31
  %v80 = vunpack.c.l.b16 %v32
  %v81 = vunpack.c.l.b16 %v33
  %v82 = vunpack.c.l.b16 %v34
  %v83 = vunpack.c.l.b16 %v35
  %v84 = vunpack.c.l.b16 %v36
  %v85 = vunpack.c.l.b16 %v37
  %v86 = vunpack.c.l.b16 %v38
  %v87 = vunpack.c.l.b16 %v39
  %v88 = vpack.c.b16 %v73, %v72
  %v89 = vpack.c.b16 %v75, %v74
  %v90 = vpack.c.b16 %v77, %v76
  %v91 = vpack.c.b16 %v79, %v78
  %v92 = vpack.c.b16 %v81, %v80
  %v93 = vpack.c.b16 %v83, %v82
  %v94 = vpack.c.b16 %v85, %v84
  %v95 = vpack.c.b16 %v87, %v86
  %v120 = vunpack.c.l.b16 %v40
  %v121 = vunpack.c.l.b16 %v41
  %v122 = vunpack.c.l.b16 %v42
  %v123 = vunpack.c.l.b16 %v43
  %v124 = vunpack.c.l.b16 %v44
  %v125 = vunpack.c.l.b16 %v45
  %v126 = vunpack.c.l.b16 %v46
  %v127 = vunpack.c.l.b16 %v47
  %v128 = vunpack.c.l.b16 %v48
  %v129 = vunpack.c.l.b16 %v49
  %v130 = vunpack.c.l.b16 %v50
  %v131 = vunpack.c.l.b16 %v51
  %v132 = vunpack.c.l.b16 %v52
  %v133 = vunpack.c.l.b16 %v53
  %v134 = vunpack.c.l.b16 %v54
  %v135 = vunpack.c.l.b16 %v55
  %v136 = vpack.c.b16 %v121, %v120
  %v137 = vpack.c.b16 %v123, %v122
  %v138 = vpack.c.b16 %v125, %v124
  %v139 = vpack.c.b16 %v127, %v126
  %v140 = vpack.c.b16 %v129, %v128
  %v141 = vpack.c.b16 %v131, %v130
  %v142 = vpack.c.b16 %v133, %v132
  %v143 = vpack.c.b16 %v135, %v134
  %152 = vmatprep.subr.bf16.mxu0 0
  %153 = vmatpush1.bf16.msra.mxu0 %v143
  %154 = vmatprep.subr.bf16.mxu0 0
  %155 = vmatpush1.bf16.msra.mxu0 %v142
  %156 = vmatprep.subr.bf16.mxu0 0
  %157 = vmatpush1.bf16.msra.mxu0 %v141
  %158 = vmatprep.subr.bf16.mxu0 0
  %159 = vmatpush1.bf16.msra.mxu0 %v140
  %160 = vmatprep.subr.bf16.mxu0 0
  %161 = vmatpush1.bf16.msra.mxu0 %v139
  %162 = vmatprep.subr.bf16.mxu0 0
  %163 = vmatpush1.bf16.msra.mxu0 %v138
  %164 = vmatprep.subr.bf16.mxu0 0
  %165 = vmatpush1.bf16.msra.mxu0 %v137
  %166 = vmatprep.subr.bf16.mxu0 0
  %167 = vmatpush1.bf16.msra.mxu0 %v136
  %168 = vmatprep.subr.bf16.mxu0 0
  %169 = vmatpush2.bf16.msra.mxu0 0
  %170 = vmatprep.subr.bf16.mxu0 0
  %171 = vmatpush2.bf16.msra.mxu0 0
  %172 = vmatprep.subr.bf16.mxu0 0
  %173 = vmatpush2.bf16.msra.mxu0 0
  %174 = vmatprep.subr.bf16.mxu0 0
  %175 = vmatpush2.bf16.msra.mxu0 0
  %176 = vmatprep.subr.bf16.mxu0 0
  %177 = vmatpush2.bf16.msra.mxu0 0
  %178 = vmatprep.subr.bf16.mxu0 0
  %179 = vmatpush2.bf16.msra.mxu0 0
  %180 = vmatprep.subr.bf16.mxu0 0
  %181 = vmatpush2.bf16.msra.mxu0 0
  %182 = vmatprep.subr.bf16.mxu0 0
  %183 = vmatpush2.bf16.msra.mxu0 0
  %184 = vmatprep.mubr.bf16.mxu0 0
  %185 = vmatmul.mubr.bf16.gmra.mxu0 %v88
  %v186 = vpop.f32.mrf.mxu0
  %v187 = vadd.f32 0.0, %v186
  %v188 = vpop.f32.mrf.mxu0
  %v189 = vpop.f32.mrf.mxu0
  %v190 = vadd.f32 0.0, %v189
  %v191 = vpop.f32.mrf.mxu0
  %192 = vmatprep.mubr.bf16.mxu0 0
  %193 = vmatmul.mubr.bf16.gmra.mxu0 %v89
  %v194 = vpop.f32.mrf.mxu0
  %v195 = vadd.f32 0.0, %v194
  %v196 = vpop.f32.mrf.mxu0
  %v197 = vpop.f32.mrf.mxu0
  %v198 = vadd.f32 0.0, %v197
  %v199 = vpop.f32.mrf.mxu0
  %200 = vmatprep.mubr.bf16.mxu0 0
  %201 = vmatmul.mubr.bf16.gmra.mxu0 %v90
  %v202 = vpop.f32.mrf.mxu0
  %v203 = vadd.f32 0.0, %v202
  %v204 = vpop.f32.mrf.mxu0
  %v205 = vpop.f32.mrf.mxu0
  %v206 = vadd.f32 0.0, %v205
  %v207 = vpop.f32.mrf.mxu0
  %208 = vmatprep.mubr.bf16.mxu0 0
  %209 = vmatmul.mubr.bf16.gmra.mxu0 %v91
  %v210 = vpop.f32.mrf.mxu0
  %v211 = vadd.f32 0.0, %v210
  %v212 = vpop.f32.mrf.mxu0
  %v213 = vpop.f32.mrf.mxu0
  %v214 = vadd.f32 0.0, %v213
  %v215 = vpop.f32.mrf.mxu0
  %216 = vmatprep.mubr.bf16.mxu0 0
  %217 = vmatmul.mubr.bf16.gmra.mxu0 %v92
  %v218 = vpop.f32.mrf.mxu0
  %v219 = vadd.f32 0.0, %v218
  %v220 = vpop.f32.mrf.mxu0
  %v221 = vpop.f32.mrf.mxu0
  %v222 = vadd.f32 0.0, %v221
  %v223 = vpop.f32.mrf.mxu0
  %224 = vmatprep.mubr.bf16.mxu0 0
  %225 = vmatmul.mubr.bf16.gmra.mxu0 %v93
  %v226 = vpop.f32.mrf.mxu0
  %v227 = vadd.f32 0.0, %v226
  %v228 = vpop.f32.mrf.mxu0
  %v229 = vpop.f32.mrf.mxu0
  %v230 = vadd.f32 0.0, %v229
  %v231 = vpop.f32.mrf.mxu0
  %232 = vmatprep.mubr.bf16.mxu0 0
  %233 = vmatmul.mubr.bf16.gmra.mxu0 %v94
  %v234 = vpop.f32.mrf.mxu0
  %v235 = vadd.f32 0.0, %v234
  %v236 = vpop.f32.mrf.mxu0
  %v237 = vpop.f32.mrf.mxu0
  %v238 = vadd.f32 0.0, %v237
  %v239 = vpop.f32.mrf.mxu0
  %240 = vmatprep.mubr.bf16.mxu0 0
  %241 = vmatmul.mubr.bf16.gmra.mxu0 %v95
  %v242 = vpop.f32.mrf.mxu0
  %v243 = vadd.f32 0.0, %v242
  %v244 = vpop.f32.mrf.mxu0
  %v245 = vpop.f32.mrf.mxu0
  %v246 = vadd.f32 0.0, %v245
  %v247 = vpop.f32.mrf.mxu0
  %248 = vdwg.mxu0
  %v249 = vld [vmem:[%s0] sm:$0xf]
  %v250 = vld [vmem:[%s0 + $0x4] sm:$0xf]
  %v251 = vld [vmem:[%s0 + $0x8] sm:$0xf]
  %v252 = vld [vmem:[%s0 + $0xc] sm:$0xf]
  %v253 = vld [vmem:[%s0 + $0x10] sm:$0xf]
  %v254 = vld [vmem:[%s0 + $0x14] sm:$0xf]
  %v255 = vld [vmem:[%s0 + $0x18] sm:$0xf]
  %v256 = vld [vmem:[%s0 + $0x1c] sm:$0xf]
  %v257 = vld [vmem:[%s0 + $0x20] sm:$0xf]
  %v258 = vld [vmem:[%s0 + $0x24] sm:$0xf]
  %v259 = vld [vmem:[%s0 + $0x28] sm:$0xf]
  %v260 = vld [vmem:[%s0 + $0x2c] sm:$0xf]
  %v261 = vld [vmem:[%s0 + $0x30] sm:$0xf]
  %v262 = vld [vmem:[%s0 + $0x34] sm:$0xf]
  %v263 = vld [vmem:[%s0 + $0x38] sm:$0xf]
  %v264 = vld [vmem:[%s0 + $0x3c] sm:$0xf]
  %v265 = vpack.c.bf16 %v190, %v187
  %v266 = vpack.c.bf16 %v198, %v195
  %v267 = vpack.c.bf16 %v206, %v203
  %v268 = vpack.c.bf16 %v214, %v211
  %v269 = vpack.c.bf16 %v222, %v219
  %v270 = vpack.c.bf16 %v230, %v227
  %v271 = vpack.c.bf16 %v238, %v235
  %v272 = vpack.c.bf16 %v246, %v243
  %v273 = vld [vmem:[%s3] sm:$0x1]
  %v275 = vlaneseq
  %v276 = vshrl.u32 %v275, 7
  %v277 = vsub.s32 0, %v276
  %v278 = vrot.slane %v273, %v277
  %v296 = vunpack.c.l.b16 %v249
  %v297 = vunpack.c.l.b16 %v250
  %v298 = vunpack.c.l.b16 %v251
  %v299 = vunpack.c.l.b16 %v252
  %v300 = vunpack.c.l.b16 %v253
  %v301 = vunpack.c.l.b16 %v254
  %v302 = vunpack.c.l.b16 %v255
  %v303 = vunpack.c.l.b16 %v256
  %v304 = vunpack.c.l.b16 %v257
  %v305 = vunpack.c.l.b16 %v258
  %v306 = vunpack.c.l.b16 %v259
  %v307 = vunpack.c.l.b16 %v260
  %v308 = vunpack.c.l.b16 %v261
  %v309 = vunpack.c.l.b16 %v262
  %v310 = vunpack.c.l.b16 %v263
  %v311 = vunpack.c.l.b16 %v264
  %v312 = vpack.c.b16 %v297, %v296
  %v313 = vpack.c.b16 %v299, %v298
  %v314 = vpack.c.b16 %v301, %v300
  %v315 = vpack.c.b16 %v303, %v302
  %v316 = vpack.c.b16 %v305, %v304
  %v317 = vpack.c.b16 %v307, %v306
  %v318 = vpack.c.b16 %v309, %v308
  %v319 = vpack.c.b16 %v311, %v310
  %328 = vmatprep.subr.bf16.mxu0 0
  %329 = vmatpush1.bf16.msra.mxu0 %v272
  %330 = vmatprep.subr.bf16.mxu0 0
  %331 = vmatpush1.bf16.msra.mxu0 %v271
  %332 = vmatprep.subr.bf16.mxu0 0
  %333 = vmatpush1.bf16.msra.mxu0 %v270
  %334 = vmatprep.subr.bf16.mxu0 0
  %335 = vmatpush1.bf16.msra.mxu0 %v269
  %336 = vmatprep.subr.bf16.mxu0 0
  %337 = vmatpush1.bf16.msra.mxu0 %v268
  %338 = vmatprep.subr.bf16.mxu0 0
  %339 = vmatpush1.bf16.msra.mxu0 %v267
  %340 = vmatprep.subr.bf16.mxu0 0
  %341 = vmatpush1.bf16.msra.mxu0 %v266
  %342 = vmatprep.subr.bf16.mxu0 0
  %343 = vmatpush1.bf16.msra.mxu0 %v265
  %344 = vmatprep.subr.bf16.mxu0 0
  %345 = vmatpush2.bf16.msra.mxu0 0
  %346 = vmatprep.subr.bf16.mxu0 0
  %347 = vmatpush2.bf16.msra.mxu0 0
  %348 = vmatprep.subr.bf16.mxu0 0
  %349 = vmatpush2.bf16.msra.mxu0 0
  %350 = vmatprep.subr.bf16.mxu0 0
  %351 = vmatpush2.bf16.msra.mxu0 0
  %352 = vmatprep.subr.bf16.mxu0 0
  %353 = vmatpush2.bf16.msra.mxu0 0
  %354 = vmatprep.subr.bf16.mxu0 0
  %355 = vmatpush2.bf16.msra.mxu0 0
  %356 = vmatprep.subr.bf16.mxu0 0
  %357 = vmatpush2.bf16.msra.mxu0 0
  %358 = vmatprep.subr.bf16.mxu0 0
  %359 = vmatpush2.bf16.msra.mxu0 0
  %360 = vmatprep.mubr.bf16.mxu0 0
  %361 = vmatmul.mubr.bf16.gmra.mxu0 %v312
  %v362 = vpop.f32.mrf.mxu0
  %v363 = vadd.f32 %v278, %v362
  %v364 = vpop.f32.mrf.mxu0
  %v365 = vpop.f32.mrf.mxu0
  %v366 = vadd.f32 %v278, %v365
  %v367 = vpop.f32.mrf.mxu0
  %368 = vmatprep.mubr.bf16.mxu0 0
  %369 = vmatmul.mubr.bf16.gmra.mxu0 %v313
  %v370 = vpop.f32.mrf.mxu0
  %v371 = vadd.f32 %v278, %v370
  %v372 = vpop.f32.mrf.mxu0
  %v373 = vpop.f32.mrf.mxu0
  %v374 = vadd.f32 %v278, %v373
  %v375 = vpop.f32.mrf.mxu0
  %376 = vmatprep.mubr.bf16.mxu0 0
  %377 = vmatmul.mubr.bf16.gmra.mxu0 %v314
  %v378 = vpop.f32.mrf.mxu0
  %v379 = vadd.f32 %v278, %v378
  %v380 = vpop.f32.mrf.mxu0
  %v381 = vpop.f32.mrf.mxu0
  %v382 = vadd.f32 %v278, %v381
  %v383 = vpop.f32.mrf.mxu0
  %384 = vmatprep.mubr.bf16.mxu0 0
  %385 = vmatmul.mubr.bf16.gmra.mxu0 %v315
  %v386 = vpop.f32.mrf.mxu0
  %v387 = vadd.f32 %v278, %v386
  %v388 = vpop.f32.mrf.mxu0
  %v389 = vpop.f32.mrf.mxu0
  %v390 = vadd.f32 %v278, %v389
  %v391 = vpop.f32.mrf.mxu0
  %392 = vmatprep.mubr.bf16.mxu0 0
  %393 = vmatmul.mubr.bf16.gmra.mxu0 %v316
  %v394 = vpop.f32.mrf.mxu0
  %v395 = vadd.f32 %v278, %v394
  %v396 = vpop.f32.mrf.mxu0
  %v397 = vpop.f32.mrf.mxu0
  %v398 = vadd.f32 %v278, %v397
  %v399 = vpop.f32.mrf.mxu0
  %400 = vmatprep.mubr.bf16.mxu0 0
  %401 = vmatmul.mubr.bf16.gmra.mxu0 %v317
  %v402 = vpop.f32.mrf.mxu0
  %v403 = vadd.f32 %v278, %v402
  %v404 = vpop.f32.mrf.mxu0
  %v405 = vpop.f32.mrf.mxu0
  %v406 = vadd.f32 %v278, %v405
  %v407 = vpop.f32.mrf.mxu0
  %408 = vmatprep.mubr.bf16.mxu0 0
  %409 = vmatmul.mubr.bf16.gmra.mxu0 %v318
  %v410 = vpop.f32.mrf.mxu0
  %v411 = vadd.f32 %v278, %v410
  %v412 = vpop.f32.mrf.mxu0
  %v413 = vpop.f32.mrf.mxu0
  %v414 = vadd.f32 %v278, %v413
  %v415 = vpop.f32.mrf.mxu0
  %416 = vmatprep.mubr.bf16.mxu0 0
  %417 = vmatmul.mubr.bf16.gmra.mxu0 %v319
  %v418 = vpop.f32.mrf.mxu0
  %v419 = vadd.f32 %v278, %v418
  %v420 = vpop.f32.mrf.mxu0
  %v421 = vpop.f32.mrf.mxu0
  %v422 = vadd.f32 %v278, %v421
  %v423 = vpop.f32.mrf.mxu0
  %424 = vdwg.mxu0
  %v425 = vpack.c.bf16 %v366, %v363
  %v426 = vpack.c.bf16 %v374, %v371
  %v427 = vpack.c.bf16 %v382, %v379
  %v428 = vpack.c.bf16 %v390, %v387
  %v429 = vpack.c.bf16 %v398, %v395
  %v430 = vpack.c.bf16 %v406, %v403
  %v431 = vpack.c.bf16 %v414, %v411
  %v432 = vpack.c.bf16 %v422, %v419
  %v433 = vld [vmem:[%s4] sm:$0xf]
  %v434 = vld [vmem:[%s4 + $0x4] sm:$0xf]
  %v435 = vld [vmem:[%s4 + $0x8] sm:$0xf]
  %v436 = vld [vmem:[%s4 + $0xc] sm:$0xf]
  %v437 = vld [vmem:[%s4 + $0x10] sm:$0xf]
  %v438 = vld [vmem:[%s4 + $0x14] sm:$0xf]
  %v439 = vld [vmem:[%s4 + $0x18] sm:$0xf]
  %v440 = vld [vmem:[%s4 + $0x1c] sm:$0xf]
  %v441 = vld [vmem:[%s4 + $0x20] sm:$0xf]
  %v442 = vld [vmem:[%s4 + $0x24] sm:$0xf]
  %v443 = vld [vmem:[%s4 + $0x28] sm:$0xf]
  %v444 = vld [vmem:[%s4 + $0x2c] sm:$0xf]
  %v445 = vld [vmem:[%s4 + $0x30] sm:$0xf]
  %v446 = vld [vmem:[%s4 + $0x34] sm:$0xf]
  %v447 = vld [vmem:[%s4 + $0x38] sm:$0xf]
  %v448 = vld [vmem:[%s4 + $0x3c] sm:$0xf]
  %v465 = vunpack.c.l.b16 %v433
  %v466 = vunpack.c.l.b16 %v434
  %v467 = vunpack.c.l.b16 %v435
  %v468 = vunpack.c.l.b16 %v436
  %v469 = vunpack.c.l.b16 %v437
  %v470 = vunpack.c.l.b16 %v438
  %v471 = vunpack.c.l.b16 %v439
  %v472 = vunpack.c.l.b16 %v440
  %v473 = vunpack.c.l.b16 %v441
  %v474 = vunpack.c.l.b16 %v442
  %v475 = vunpack.c.l.b16 %v443
  %v476 = vunpack.c.l.b16 %v444
  %v477 = vunpack.c.l.b16 %v445
  %v478 = vunpack.c.l.b16 %v446
  %v479 = vunpack.c.l.b16 %v447
  %v480 = vunpack.c.l.b16 %v448
  %v481 = vpack.c.b16 %v466, %v465
  %v482 = vpack.c.b16 %v468, %v467
  %v483 = vpack.c.b16 %v470, %v469
  %v484 = vpack.c.b16 %v472, %v471
  %v485 = vpack.c.b16 %v474, %v473
  %v486 = vpack.c.b16 %v476, %v475
  %v487 = vpack.c.b16 %v478, %v477
  %v488 = vpack.c.b16 %v480, %v479
  %497 = vmatprep.subr.bf16.mxu0 0
  %498 = vmatpush1.bf16.msra.mxu0 %v488
  %499 = vmatprep.subr.bf16.mxu0 0
  %500 = vmatpush1.bf16.msra.mxu0 %v487
  %501 = vmatprep.subr.bf16.mxu0 0
  %502 = vmatpush1.bf16.msra.mxu0 %v486
  %503 = vmatprep.subr.bf16.mxu0 0
  %504 = vmatpush1.bf16.msra.mxu0 %v485
  %505 = vmatprep.subr.bf16.mxu0 0
  %506 = vmatpush1.bf16.msra.mxu0 %v484
  %507 = vmatprep.subr.bf16.mxu0 0
  %508 = vmatpush1.bf16.msra.mxu0 %v483
  %509 = vmatprep.subr.bf16.mxu0 0
  %510 = vmatpush1.bf16.msra.mxu0 %v482
  %511 = vmatprep.subr.bf16.mxu0 0
  %512 = vmatpush1.bf16.msra.mxu0 %v481
  %513 = vmatprep.subr.bf16.mxu0 0
  %514 = vmatpush2.bf16.msra.mxu0 0
  %515 = vmatprep.subr.bf16.mxu0 0
  %516 = vmatpush2.bf16.msra.mxu0 0
  %517 = vmatprep.subr.bf16.mxu0 0
  %518 = vmatpush2.bf16.msra.mxu0 0
  %519 = vmatprep.subr.bf16.mxu0 0
  %520 = vmatpush2.bf16.msra.mxu0 0
  %521 = vmatprep.subr.bf16.mxu0 0
  %522 = vmatpush2.bf16.msra.mxu0 0
  %523 = vmatprep.subr.bf16.mxu0 0
  %524 = vmatpush2.bf16.msra.mxu0 0
  %525 = vmatprep.subr.bf16.mxu0 0
  %526 = vmatpush2.bf16.msra.mxu0 0
  %527 = vmatprep.subr.bf16.mxu0 0
  %528 = vmatpush2.bf16.msra.mxu0 0
  %529 = vmatprep.mubr.bf16.mxu0 0
  %530 = vmatmul.mubr.bf16.gmra.mxu0 %v425
  %v531 = vpop.f32.mrf.mxu0
  %v532 = vadd.f32 0.0, %v531
  %v533 = vpop.f32.mrf.mxu0
  %v534 = vpop.f32.mrf.mxu0
  %v535 = vadd.f32 0.0, %v534
  %v536 = vpop.f32.mrf.mxu0
  %537 = vmatprep.mubr.bf16.mxu0 0
  %538 = vmatmul.mubr.bf16.gmra.mxu0 %v426
  %v539 = vpop.f32.mrf.mxu0
  %v540 = vadd.f32 0.0, %v539
  %v541 = vpop.f32.mrf.mxu0
  %v542 = vpop.f32.mrf.mxu0
  %v543 = vadd.f32 0.0, %v542
  %v544 = vpop.f32.mrf.mxu0
  %545 = vmatprep.mubr.bf16.mxu0 0
  %546 = vmatmul.mubr.bf16.gmra.mxu0 %v427
  %v547 = vpop.f32.mrf.mxu0
  %v548 = vadd.f32 0.0, %v547
  %v549 = vpop.f32.mrf.mxu0
  %v550 = vpop.f32.mrf.mxu0
  %v551 = vadd.f32 0.0, %v550
  %v552 = vpop.f32.mrf.mxu0
  %553 = vmatprep.mubr.bf16.mxu0 0
  %554 = vmatmul.mubr.bf16.gmra.mxu0 %v428
  %v555 = vpop.f32.mrf.mxu0
  %v556 = vadd.f32 0.0, %v555
  %v557 = vpop.f32.mrf.mxu0
  %v558 = vpop.f32.mrf.mxu0
  %v559 = vadd.f32 0.0, %v558
  %v560 = vpop.f32.mrf.mxu0
  %561 = vmatprep.mubr.bf16.mxu0 0
  %562 = vmatmul.mubr.bf16.gmra.mxu0 %v429
  %v563 = vpop.f32.mrf.mxu0
  %v564 = vadd.f32 0.0, %v563
  %v565 = vpop.f32.mrf.mxu0
  %v566 = vpop.f32.mrf.mxu0
  %v567 = vadd.f32 0.0, %v566
  %v568 = vpop.f32.mrf.mxu0
  %569 = vmatprep.mubr.bf16.mxu0 0
  %570 = vmatmul.mubr.bf16.gmra.mxu0 %v430
  %v571 = vpop.f32.mrf.mxu0
  %v572 = vadd.f32 0.0, %v571
  %v573 = vpop.f32.mrf.mxu0
  %v574 = vpop.f32.mrf.mxu0
  %v575 = vadd.f32 0.0, %v574
  %v576 = vpop.f32.mrf.mxu0
  %577 = vmatprep.mubr.bf16.mxu0 0
  %578 = vmatmul.mubr.bf16.gmra.mxu0 %v431
  %v579 = vpop.f32.mrf.mxu0
  %v580 = vadd.f32 0.0, %v579
  %v581 = vpop.f32.mrf.mxu0
  %v582 = vpop.f32.mrf.mxu0
  %v583 = vadd.f32 0.0, %v582
  %v584 = vpop.f32.mrf.mxu0
  %585 = vmatprep.mubr.bf16.mxu0 0
  %586 = vmatmul.mubr.bf16.gmra.mxu0 %v432
  %v587 = vpop.f32.mrf.mxu0
  %v588 = vadd.f32 0.0, %v587
  %v589 = vpop.f32.mrf.mxu0
  %v590 = vpop.f32.mrf.mxu0
  %v591 = vadd.f32 0.0, %v590
  %v592 = vpop.f32.mrf.mxu0
  %593 = vdwg.mxu0
  %v594 = vpack.c.bf16 %v535, %v532
  %v595 = vpack.c.bf16 %v543, %v540
  %v596 = vpack.c.bf16 %v551, %v548
  %v597 = vpack.c.bf16 %v559, %v556
  %v598 = vpack.c.bf16 %v567, %v564
  %v599 = vpack.c.bf16 %v575, %v572
  %v600 = vpack.c.bf16 %v583, %v580
  %v601 = vpack.c.bf16 %v591, %v588
  %v602 = vld [vmem:[%s5] sm:$0x1]
  %v604 = vlaneseq
  %v605 = vshrl.u32 %v604, 7
  %v606 = vsub.s32 0, %v605
  %v607 = vrot.slane %v602, %v606
  %609 = vmatprep.subr.bf16.mxu0 0
  %610 = vmatpush1.bf16.msra.mxu0 %v601
  %611 = vmatprep.subr.bf16.mxu0 0
  %612 = vmatpush1.bf16.msra.mxu0 %v600
  %613 = vmatprep.subr.bf16.mxu0 0
  %614 = vmatpush1.bf16.msra.mxu0 %v599
  %615 = vmatprep.subr.bf16.mxu0 0
  %616 = vmatpush1.bf16.msra.mxu0 %v598
  %617 = vmatprep.subr.bf16.mxu0 0
  %618 = vmatpush1.bf16.msra.mxu0 %v597
  %619 = vmatprep.subr.bf16.mxu0 0
  %620 = vmatpush1.bf16.msra.mxu0 %v596
  %621 = vmatprep.subr.bf16.mxu0 0
  %622 = vmatpush1.bf16.msra.mxu0 %v595
  %623 = vmatprep.subr.bf16.mxu0 0
  %624 = vmatpush1.bf16.msra.mxu0 %v594
  %625 = vmatprep.subr.bf16.mxu0 0
  %626 = vmatpush2.bf16.msra.mxu0 0
  %627 = vmatprep.subr.bf16.mxu0 0
  %628 = vmatpush2.bf16.msra.mxu0 0
  %629 = vmatprep.subr.bf16.mxu0 0
  %630 = vmatpush2.bf16.msra.mxu0 0
  %631 = vmatprep.subr.bf16.mxu0 0
  %632 = vmatpush2.bf16.msra.mxu0 0
  %633 = vmatprep.subr.bf16.mxu0 0
  %634 = vmatpush2.bf16.msra.mxu0 0
  %635 = vmatprep.subr.bf16.mxu0 0
  %636 = vmatpush2.bf16.msra.mxu0 0
  %637 = vmatprep.subr.bf16.mxu0 0
  %638 = vmatpush2.bf16.msra.mxu0 0
  %639 = vmatprep.subr.bf16.mxu0 0
  %640 = vmatpush2.bf16.msra.mxu0 0
  %641 = vmatprep.mubr.bf16.mxu0 0
  %642 = vmatmul.mubr.bf16.gmra.mxu0 %v312
  %v643 = vpop.f32.mrf.mxu0
  %v644 = vadd.f32 %v607, %v643
  %v645 = vpop.f32.mrf.mxu0
  %v646 = vpop.f32.mrf.mxu0
  %v647 = vadd.f32 %v607, %v646
  %v648 = vpop.f32.mrf.mxu0
  %649 = vmatprep.mubr.bf16.mxu0 0
  %650 = vmatmul.mubr.bf16.gmra.mxu0 %v313
  %v651 = vpop.f32.mrf.mxu0
  %v652 = vadd.f32 %v607, %v651
  %v653 = vpop.f32.mrf.mxu0
  %v654 = vpop.f32.mrf.mxu0
  %v655 = vadd.f32 %v607, %v654
  %v656 = vpop.f32.mrf.mxu0
  %657 = vmatprep.mubr.bf16.mxu0 0
  %658 = vmatmul.mubr.bf16.gmra.mxu0 %v314
  %v659 = vpop.f32.mrf.mxu0
  %v660 = vadd.f32 %v607, %v659
  %v661 = vpop.f32.mrf.mxu0
  %v662 = vpop.f32.mrf.mxu0
  %v663 = vadd.f32 %v607, %v662
  %v664 = vpop.f32.mrf.mxu0
  %665 = vmatprep.mubr.bf16.mxu0 0
  %666 = vmatmul.mubr.bf16.gmra.mxu0 %v315
  %v667 = vpop.f32.mrf.mxu0
  %v668 = vadd.f32 %v607, %v667
  %v669 = vpop.f32.mrf.mxu0
  %v670 = vpop.f32.mrf.mxu0
  %v671 = vadd.f32 %v607, %v670
  %v672 = vpop.f32.mrf.mxu0
  %673 = vmatprep.mubr.bf16.mxu0 0
  %674 = vmatmul.mubr.bf16.gmra.mxu0 %v316
  %v675 = vpop.f32.mrf.mxu0
  %v676 = vadd.f32 %v607, %v675
  %v677 = vpop.f32.mrf.mxu0
  %v678 = vpop.f32.mrf.mxu0
  %v679 = vadd.f32 %v607, %v678
  %v680 = vpop.f32.mrf.mxu0
  %681 = vmatprep.mubr.bf16.mxu0 0
  %682 = vmatmul.mubr.bf16.gmra.mxu0 %v317
  %v683 = vpop.f32.mrf.mxu0
  %v684 = vadd.f32 %v607, %v683
  %v685 = vpop.f32.mrf.mxu0
  %v686 = vpop.f32.mrf.mxu0
  %v687 = vadd.f32 %v607, %v686
  %v688 = vpop.f32.mrf.mxu0
  %689 = vmatprep.mubr.bf16.mxu0 0
  %690 = vmatmul.mubr.bf16.gmra.mxu0 %v318
  %v691 = vpop.f32.mrf.mxu0
  %v692 = vadd.f32 %v607, %v691
  %v693 = vpop.f32.mrf.mxu0
  %v694 = vpop.f32.mrf.mxu0
  %v695 = vadd.f32 %v607, %v694
  %v696 = vpop.f32.mrf.mxu0
  %697 = vmatprep.mubr.bf16.mxu0 0
  %698 = vmatmul.mubr.bf16.gmra.mxu0 %v319
  %v699 = vpop.f32.mrf.mxu0
  %v700 = vadd.f32 %v607, %v699
  %v701 = vpop.f32.mrf.mxu0
  %v702 = vpop.f32.mrf.mxu0
  %v703 = vadd.f32 %v607, %v702
  %v704 = vpop.f32.mrf.mxu0
  %705 = vdwg.mxu0
  %706 = vst [vmem:[%s6] sm:$0xff] %v644
  %707 = vst [vmem:[%s6 + $0x8] sm:$0xff] %v647
  %708 = vst [vmem:[%s6 + $0x10] sm:$0xff] %v652
  %709 = vst [vmem:[%s6 + $0x18] sm:$0xff] %v655
  %710 = vst [vmem:[%s6 + $0x20] sm:$0xff] %v660
  %711 = vst [vmem:[%s6 + $0x28] sm:$0xff] %v663
  %712 = vst [vmem:[%s6 + $0x30] sm:$0xff] %v668
  %713 = vst [vmem:[%s6 + $0x38] sm:$0xff] %v671
  %714 = vst [vmem:[%s6 + $0x40] sm:$0xff] %v676
  %715 = vst [vmem:[%s6 + $0x48] sm:$0xff] %v679
  %716 = vst [vmem:[%s6 + $0x50] sm:$0xff] %v684
  %717 = vst [vmem:[%s6 + $0x58] sm:$0xff] %v687
  %718 = vst [vmem:[%s6 + $0x60] sm:$0xff] %v692
  %719 = vst [vmem:[%s6 + $0x68] sm:$0xff] %v695
  %720 = vst [vmem:[%s6 + $0x70] sm:$0xff] %v700
  %721 = vst [vmem:[%s6 + $0x78] sm:$0xff] %v703
  // Predicated region
  $region26: #{multi_gnn_forward.1} parent=0 // pred_check
    _
  $region27: #{multi_gnn_forward.1} parent=0 // pred_check_branch
    %723 = sbr.rel (0) target = $region29
  $region28: #{multi_gnn_forward.1} parent=0 // pred_region
    _
  $region29: #{multi_gnn_forward.1} parent=0 // pred_fallthru
    _
  // Predicated region
  $region30: #{multi_gnn_forward.1} parent=0 // pred_check
    _
  $region31: #{multi_gnn_forward.1} parent=0 // pred_check_branch
    %725 = sbr.rel (0) target = $region33
  $region32: #{multi_gnn_forward.1} parent=0 // pred_region
    _
  $region33: #{multi_gnn_forward.1} parent=0 // pred_fallthru
    _

</llo_original>
